<compile_context>
chip_gen: v6e
topology: v6e:2x2x1
jax: 0.10.0
libtpu: 0.0.40
codegen_flags: <defaults>
</compile_context>

<pallas_src>
import jax
import jax.numpy as jnp
from jax.experimental import pallas as pl
from jax.experimental.pallas import tpu as pltpu


def _make_hbm_copy_kernel(chunk_rows: int):
    """Kernel factory: each grid step DMAs one row-chunk HBM->HBM (no VMEM)."""

    def kernel(src_hbm, dst_hbm, sem):
        start = pl.multiple_of(pl.program_id(0) * chunk_rows, chunk_rows)
        cp = pltpu.make_async_copy(
            src_hbm.at[pl.ds(start, chunk_rows)],
            dst_hbm.at[pl.ds(start, chunk_rows)],
            sem,
        )
        cp.start()
        cp.wait()

    return kernel


def _num_chunks(rows: int, total_bytes: int, chunk_bytes: int, max_chunks: int = 8) -> int:
    """Pick a chunk count that divides `rows` exactly (keeps every DMA in-bounds
    with static sizes) and targets ~chunk_bytes per DMA; 1 for small params."""
    if rows <= 1 or total_bytes <= chunk_bytes:
        return 1
    want = int(min(max_chunks, max(2, total_bytes // chunk_bytes)))
    for nc in range(want, 1, -1):
        if rows % nc == 0:
            return nc
    return 1


def parameter_wrapper_forward(param, *, copy: bool = False,
                              chunk_bytes: int = 8 * 1024 * 1024):
    """Pallas equivalent of ParameterWrapper.forward(): return the parameter.

    copy=False (default): true identity — returns `param` as-is, zero cost.
    copy=True: materialize a distinct output buffer via direct HBM->HBM DMA
    (works for any rank/shape/dtype, including 1-D and scalar parameters, with
    zero VMEM footprint on v5e/v6e/v7x).
    """
    if not copy:
        return param

    orig_shape = param.shape
    p = param.reshape(1, 1) if param.ndim == 0 else param

    rows = p.shape[0]
    total_bytes = p.size * jnp.dtype(p.dtype).itemsize
    nc = _num_chunks(rows, total_bytes, chunk_bytes)
    chunk_rows = rows // nc

    out = pl.pallas_call(
        _make_hbm_copy_kernel(chunk_rows),
        out_shape=jax.ShapeDtypeStruct(p.shape, p.dtype),
        grid=(nc,),
        in_specs=[pl.BlockSpec(memory_space=pl.ANY)],
        out_specs=pl.BlockSpec(memory_space=pl.ANY),
        scratch_shapes=[pltpu.SemaphoreType.DMA(())],
        compiler_params=pltpu.CompilerParams(
            dimension_semantics=("parallel",),
        ),
        cost_estimate=pl.CostEstimate(
            flops=0, transcendentals=0, bytes_accessed=2 * total_bytes),
    )(p)
    return out.reshape(orig_shape)


if __name__ == "__main__":
    key = jax.random.PRNGKey(0)
    k1, k2, k3, k4 = jax.random.split(key, 4)

    # (a) Default path: true identity (same array object, zero HBM traffic),
    #     matching PyTorch's `return self.param`.
    param_a = jax.random.normal(k1, (256, 512), dtype=jnp.float32)
    out_a = jax.block_until_ready(parameter_wrapper_forward(param_a))
    assert out_a is param_a
    assert bool(jnp.array_equal(out_a, param_a))

    # (b) Copy path, small param -> single whole-array HBM->HBM DMA (grid=(1,)).
    out_b = jax.block_until_ready(parameter_wrapper_forward(param_a, copy=True))
    assert out_b.shape == param_a.shape and out_b.dtype == param_a.dtype
    assert bool(jnp.array_equal(out_b, param_a))

    # (c) Copy path, forced multi-chunk "parallel" grid: bf16 (512, 256) with a
    #     64 KiB chunk budget -> 4 chunks of 128 rows (each its own DMA; on v7x
    #     the two TensorCores split them).
    param_c = jax.random.normal(k2, (512, 256)).astype(jnp.bfloat16)
    out_c = jax.block_until_ready(
        parameter_wrapper_forward(param_c, copy=True, chunk_bytes=64 * 1024))
    assert out_c.shape == param_c.shape and out_c.dtype == param_c.dtype
    assert bool(jnp.array_equal(out_c, param_c))

    # (d) Higher-rank parameter: DMA copies the 3-D array directly (no VMEM
    #     layout constraints to satisfy).
    param_d = jax.random.normal(k3, (4, 16, 32), dtype=jnp.float32)
    out_d = jax.block_until_ready(parameter_wrapper_forward(param_d, copy=True))
    assert out_d.shape == param_d.shape
    assert bool(jnp.array_equal(out_d, param_d))

    # (e) 1-D and scalar parameters: previously a VMEM-layout hazard, now just
    #     plain byte-streaming DMAs.
    param_e = jax.random.normal(k4, (1000,), dtype=jnp.float32)
    out_e = jax.block_until_ready(parameter_wrapper_forward(param_e, copy=True))
    assert bool(jnp.array_equal(out_e, param_e))

    param_f = jnp.float32(3.5)
    out_f = jax.block_until_ready(parameter_wrapper_forward(param_f, copy=True))
    assert out_f.shape == () and bool(out_f == param_f)

    # (f) Identity path also works under jit (still zero extra HBM traffic).
    jit_fwd = jax.jit(parameter_wrapper_forward)
    out_g = jax.block_until_ready(jit_fwd(param_a))
    assert bool(jnp.array_equal(out_g, param_a))

    print("KERNEL_OK")
</pallas_src>

<mosaic_0001>
module attributes {stable_mosaic.version = 11 : i64} {
  func.func @kernel(%arg0: i32, %arg1: memref<256x512xf32, #tpu.memory_space<any>>, %arg2: memref<256x512xf32, #tpu.memory_space<any>>, %arg3: memref<!tpu.dma_semaphore, #tpu.memory_space<semaphore_mem>>) attributes {dimension_semantics = [#tpu.dimension_semantics<parallel>], iteration_bounds = array<i64: 1>, scalar_prefetch = 0 : i64, scratch_operands = 1 : i64, tpu.core_type = #tpu.core_type<tc>, window_params = [{}, {}]} {
    %c256_i32 = arith.constant 256 : i32
    %0 = arith.muli %arg0, %c256_i32 : i32
    %1 = tpu.assume_multiple %0, 256 : i32
    %c0_i32 = arith.constant 0 : i32
    %2 = tpu.memref_slice %arg1[%1, %c0_i32] : memref<256x512xf32, #tpu.memory_space<any>> -> memref<256x512xf32, #tpu.memory_space<any>>
    %c0_i32_0 = arith.constant 0 : i32
    %3 = tpu.memref_slice %arg2[%1, %c0_i32_0] : memref<256x512xf32, #tpu.memory_space<any>> -> memref<256x512xf32, #tpu.memory_space<any>>
    tpu.enqueue_dma source(%2 : memref<256x512xf32, #tpu.memory_space<any>>) target(%3 : memref<256x512xf32, #tpu.memory_space<any>>) target_semaphore(%arg3 : memref<!tpu.dma_semaphore, #tpu.memory_space<semaphore_mem>>)
    %c0_i32_1 = arith.constant 0 : i32
    %4 = tpu.memref_slice %arg1[%1, %c0_i32_1] : memref<256x512xf32, #tpu.memory_space<any>> -> memref<256x512xf32, #tpu.memory_space<any>>
    %c0_i32_2 = arith.constant 0 : i32
    %5 = tpu.memref_slice %arg2[%1, %c0_i32_2] : memref<256x512xf32, #tpu.memory_space<any>> -> memref<256x512xf32, #tpu.memory_space<any>>
    tpu.wait_dma2 semaphore(%arg3 : memref<!tpu.dma_semaphore, #tpu.memory_space<semaphore_mem>>) src(%4 : memref<256x512xf32, #tpu.memory_space<any>>) dst(%5 : memref<256x512xf32, #tpu.memory_space<any>>)
    return
  }
}

</mosaic_0001>

<llo_original>
// kernel: tpu_custom_call.1
$region0: #{tpu_custom_call.1}
  #allocation0 [shape = 'u32[]', space=smem, size = 0x4, offset = 0x4, fixed_abs, tag = 'smem constant byte address 0x4 - core index']
  #allocation1 [shape = 'u32[144,128]{1,0:T(1,128)}', space=vmem, size = 0x12000, scoped, tag = 'internal scratch']
  #allocation2 [shape = 's32[1]{0}', space=sflag, size = 0x4, scoped, tag = 'scratch operand']
  #allocation3 [shape = 's32[]', space=sflag, size = 0x4, offset = 0, fixed_abs, tag = 'sflag constant byte address 0x0 - dummy sync flag']
  #allocation4 [shape = 'u32[0]{0}', space=smem, size = 0, offset = 0, fixed_abs, tag = 'smem constant byte address 0x0 - null']
  %s0 = inlined_call_operand.hbm [shape: f32[256,512], index: 0, kind: input, shape index: {}]
  %s1 = inlined_call_operand.hbm [shape: f32[256,512], index: 1, kind: output, shape index: {}]
  %s2 = sld [smem:[#allocation0]]
  $region2: #{tpu_custom_call.1} parent=0
    _
  %s4 = ssub.s32 1, %s2
  %s5 = scalar_select 0, %s4, %s2
  %s6 = smul.u32 0, 256
  %s7 = sshra.s32 %s6, 3
  %s8 = sand.u32 %s6, 7
  %s9 = smul.u32 %s7, 4
  %s10 = smul.addr %s9, 128
  %s11 = scalar_lea.hbm %s0, %s10
  %s12 = smul.addr %s9, 128
  %s13 = scalar_lea.hbm %s1, %s12
  %s15 = sshll.u32 1, 14
  %s16 = sxor.u32 4294967295, %s15
  %20 = dma.general %s11, 16384, %s13, [#allocation2], 131072, [#allocation4], 0, 0
  %s21 = smul.u32 8, 32
  %s22 = smul.u32 %s21, 4
  %s23 = sshll.u32 %s22, 4
  %24 = dma.done [#allocation2], %s23
  %25 = vsyncmov [#allocation2]
  %s26 = vpop.sfrf %25
  %p27 = scmp.eq.s32.totalorder %s26, 0
  %p28 = pneg %p27
  %30 = shalt.err (%p28)

</llo_original>
